<compile_context>
chip_gen: v7x
topology: tpu7x:2x2x1
jax: 0.10.0
libtpu: 0.0.40
codegen_flags: <defaults>
</compile_context>

<pallas_src>
import functools

import jax
import jax.numpy as jnp
from jax.experimental import pallas as pl
from jax.experimental.pallas import tpu as pltpu


def _layernorm_kernel(tid_ref, x_ref, gamma_ref, beta_ref, o_ref, *,
                      eps: float, affine: bool):
    # tid_ref: scalar-prefetch tile->type-id table (consumed by the index_maps).
    del tid_ref
    x = x_ref[...].astype(jnp.float32)                      # (TILE_N, D)
    d = x.shape[-1]
    mean = jnp.sum(x, axis=-1, keepdims=True) * (1.0 / d)
    xc = x - mean
    var = jnp.sum(xc * xc, axis=-1, keepdims=True) * (1.0 / d)  # biased, as nn.LayerNorm
    y = xc * jax.lax.rsqrt(var + eps)
    if affine:
        gamma = gamma_ref[0]                                # (1, D)
        beta = beta_ref[0]                                  # (1, D)
        y = y * gamma + beta
    o_ref[...] = y.astype(o_ref.dtype)


def _round_up(x: int, m: int) -> int:
    return ((x + m - 1) // m) * m


def layer_norm_grouped(tensors, gammas, betas, *, eps: float = 1e-5,
                       affine: bool = True):
    """Fused LayerNorm over a list of (N_t, D) arrays sharing the same D.

    One pallas_call for the whole group; per-type gamma/beta are selected
    per row-tile via scalar prefetch.  Returns a list of per-type outputs.
    """
    if not tensors:
        return []
    D = tensors[0].shape[1]
    out_dtype = tensors[0].dtype
    num_types = len(tensors)

    # Row-tile size: multiple of 8 (sublane), capped so the f32 block stays small
    # (block bytes * ~4 for double-buffered in+out << 32 MiB scoped VMEM, and well
    # under v7x's 64 MiB physical VMEM).
    max_n = max(t.shape[0] for t in tensors)
    max_tile_rows = max(8, ((4 * 1024 * 1024) // (D * 4)) // 8 * 8)
    tile_n = min(512, max_tile_rows, _round_up(max_n, 8))

    # Pad each type's rows to a multiple of tile_n, concatenate, and build the
    # tile -> type-id table.
    padded, row_counts, tile_type_ids = [], [], []
    for t_idx, x in enumerate(tensors):
        n = x.shape[0]
        n_pad = _round_up(max(n, 1), tile_n)
        if n_pad != n:
            x = jnp.pad(x, ((0, n_pad - n), (0, 0)))
        padded.append(x)
        row_counts.append((n, n_pad))
        tile_type_ids.extend([t_idx] * (n_pad // tile_n))

    X = jnp.concatenate(padded, axis=0) if len(padded) > 1 else padded[0]
    G = jnp.stack([g.astype(jnp.float32) for g in gammas]).reshape(num_types, 1, D)
    B = jnp.stack([b.astype(jnp.float32) for b in betas]).reshape(num_types, 1, D)
    tids = jnp.asarray(tile_type_ids, dtype=jnp.int32)
    num_tiles = X.shape[0] // tile_n

    grid_spec = pltpu.PrefetchScalarGridSpec(
        num_scalar_prefetch=1,
        grid=(num_tiles,),
        in_specs=[
            pl.BlockSpec((tile_n, D), lambda i, tid: (i, 0)),
            pl.BlockSpec((1, 1, D), lambda i, tid: (tid[i], 0, 0)),
            pl.BlockSpec((1, 1, D), lambda i, tid: (tid[i], 0, 0)),
        ],
        out_specs=pl.BlockSpec((tile_n, D), lambda i, tid: (i, 0)),
    )

    out = pl.pallas_call(
        functools.partial(_layernorm_kernel, eps=eps, affine=affine),
        out_shape=jax.ShapeDtypeStruct(X.shape, out_dtype),
        grid_spec=grid_spec,
        compiler_params=pltpu.CompilerParams(
            dimension_semantics=("parallel",)),   # row tiles are independent
    )(tids, X, G, B)

    # Split back into per-type views, dropping the row padding.
    results, off = [], 0
    for n, n_pad in row_counts:
        results.append(out[off:off + n])
        off += n_pad
    return results


class LayerNormalizationPallas:
    """JAX/Pallas equivalent of the PyTorch LayerNormalization module."""

    def __init__(self, node_types, edge_types, node_hidden_dim, edge_hidden_dim,
                 affine: bool = True):
        self.affine = affine
        # nn.LayerNorm init: weight=1, bias=0 (deterministic).
        self.node_params = {
            nt: (jnp.ones((node_hidden_dim,), jnp.float32),
                 jnp.zeros((node_hidden_dim,), jnp.float32))
            for nt in node_types
        }
        self.edge_params = {
            et: (jnp.ones((edge_hidden_dim,), jnp.float32),
                 jnp.zeros((edge_hidden_dim,), jnp.float32))
            for et in edge_types
        }

    def __call__(self, _graph, feat):
        node_feat, edge_feat = feat

        out_nodes = {}
        if node_feat:
            keys = list(node_feat.keys())
            outs = layer_norm_grouped(
                [node_feat[k] for k in keys],
                [self.node_params[k][0] for k in keys],
                [self.node_params[k][1] for k in keys],
                affine=self.affine)
            out_nodes = dict(zip(keys, outs))

        out_edges = {}
        if edge_feat:
            keys = list(edge_feat.keys())
            outs = layer_norm_grouped(
                [edge_feat[k] for k in keys],
                [self.edge_params[k[1]][0] for k in keys],   # canonical etype -> middle name
                [self.edge_params[k[1]][1] for k in keys],
                affine=self.affine)
            out_edges = dict(zip(keys, outs))

        return out_nodes, out_edges


def _layernorm_ref(x, eps=1e-5):
    x = x.astype(jnp.float32)
    mean = jnp.mean(x, axis=-1, keepdims=True)
    var = jnp.mean((x - mean) ** 2, axis=-1, keepdims=True)
    return (x - mean) * jax.lax.rsqrt(var + eps)


if __name__ == "__main__":
    key = jax.random.PRNGKey(0)

    node_types = ["author", "paper"]
    edge_types = ["writes", "cites"]
    node_hidden_dim = 32
    edge_hidden_dim = 16

    k1, k2, k3, k4 = jax.random.split(key, 4)
    node_feat = {
        "author": jax.random.normal(k1, (8, node_hidden_dim), jnp.float32),
        "paper": jax.random.normal(k2, (16, node_hidden_dim), jnp.float32),
    }
    edge_feat = {
        ("author", "writes", "paper"): jax.random.normal(k3, (8, edge_hidden_dim), jnp.float32),
        ("paper", "cites", "paper"): jax.random.normal(k4, (16, edge_hidden_dim), jnp.float32),
    }

    module = LayerNormalizationPallas(node_types, edge_types,
                                      node_hidden_dim, edge_hidden_dim, affine=True)
    out_nodes, out_edges = module(None, (node_feat, edge_feat))

    for v in list(out_nodes.values()) + list(out_edges.values()):
        jax.block_until_ready(v)

    # Correctness check vs. pure-JAX LayerNorm (gamma=1, beta=0 at init).
    for k, v in node_feat.items():
        ref = _layernorm_ref(v)
        assert out_nodes[k].shape == v.shape
        assert jnp.allclose(out_nodes[k], ref, atol=1e-5, rtol=1e-5), k
    for k, v in edge_feat.items():
        ref = _layernorm_ref(v)
        assert out_edges[k].shape == v.shape
        assert jnp.allclose(out_edges[k], ref, atol=1e-5, rtol=1e-5), k

    print("KERNEL_OK")
</pallas_src>

<mosaic_0001>
module attributes {stable_mosaic.version = 11 : i64} {
  func.func @_layernorm_kernel(%arg0: i32, %arg1: memref<2xi32, #tpu.memory_space<smem>>, %arg2: memref<16x32xf32, #tpu.memory_space<vmem>>, %arg3: memref<1x1x32xf32, #tpu.memory_space<vmem>>, %arg4: memref<1x1x32xf32, #tpu.memory_space<vmem>>, %arg5: memref<16x32xf32, #tpu.memory_space<vmem>>) attributes {dimension_semantics = [#tpu.dimension_semantics<parallel>], iteration_bounds = array<i64: 2>, scalar_prefetch = 1 : i64, scratch_operands = 0 : i64, tpu.core_type = #tpu.core_type<tc>, window_params = [{transform_indices = @transform_0, window_bounds = array<i64: 16, 32>}, {transform_indices = @transform_1, window_bounds = array<i64: 1, 1, 32>}, {transform_indices = @transform_2, window_bounds = array<i64: 1, 1, 32>}, {transform_indices = @transform_3, window_bounds = array<i64: 16, 32>}]} {
    %c0 = arith.constant 0 : index
    %c0_0 = arith.constant 0 : index
    %0 = vector.load %arg2[%c0, %c0_0] : memref<16x32xf32, #tpu.memory_space<vmem>>, vector<16x32xf32>
    %cst = arith.constant dense<0.000000e+00> : vector<16xf32>
    %1 = vector.multi_reduction <add>, %0, %cst [1] : vector<16x32xf32> to vector<16xf32>
    %2 = vector.shape_cast %1 : vector<16xf32> to vector<16x1xf32>
    %cst_1 = arith.constant 3.125000e-02 : f32
    %3 = vector.broadcast %cst_1 : f32 to vector<16x1xf32>
    %4 = arith.mulf %2, %3 : vector<16x1xf32>
    %5 = vector.broadcast %4 : vector<16x1xf32> to vector<16x32xf32>
    %6 = arith.subf %0, %5 : vector<16x32xf32>
    %7 = arith.mulf %6, %6 : vector<16x32xf32>
    %cst_2 = arith.constant dense<0.000000e+00> : vector<16xf32>
    %8 = vector.multi_reduction <add>, %7, %cst_2 [1] : vector<16x32xf32> to vector<16xf32>
    %9 = vector.shape_cast %8 : vector<16xf32> to vector<16x1xf32>
    %cst_3 = arith.constant 3.125000e-02 : f32
    %10 = vector.broadcast %cst_3 : f32 to vector<16x1xf32>
    %11 = arith.mulf %9, %10 : vector<16x1xf32>
    %cst_4 = arith.constant 9.99999974E-6 : f32
    %12 = vector.broadcast %cst_4 : f32 to vector<16x1xf32>
    %13 = arith.addf %11, %12 : vector<16x1xf32>
    %14 = math.rsqrt %13 : vector<16x1xf32>
    %15 = vector.broadcast %14 : vector<16x1xf32> to vector<16x32xf32>
    %16 = arith.mulf %6, %15 : vector<16x32xf32>
    %c0_5 = arith.constant 0 : index
    %c0_6 = arith.constant 0 : index
    %c0_7 = arith.constant 0 : index
    %17 = vector.load %arg3[%c0_5, %c0_6, %c0_7] : memref<1x1x32xf32, #tpu.memory_space<vmem>>, vector<1x1x32xf32>
    %18 = vector.shape_cast %17 : vector<1x1x32xf32> to vector<1x32xf32>
    %c0_8 = arith.constant 0 : index
    %c0_9 = arith.constant 0 : index
    %c0_10 = arith.constant 0 : index
    %19 = vector.load %arg4[%c0_8, %c0_9, %c0_10] : memref<1x1x32xf32, #tpu.memory_space<vmem>>, vector<1x1x32xf32>
    %20 = vector.shape_cast %19 : vector<1x1x32xf32> to vector<1x32xf32>
    %21 = vector.broadcast %18 : vector<1x32xf32> to vector<16x32xf32>
    %22 = arith.mulf %16, %21 : vector<16x32xf32>
    %23 = vector.broadcast %20 : vector<1x32xf32> to vector<16x32xf32>
    %24 = arith.addf %22, %23 : vector<16x32xf32>
    %c0_11 = arith.constant 0 : index
    %c0_12 = arith.constant 0 : index
    %25 = vector.load %arg5[%c0_11, %c0_12] : memref<16x32xf32, #tpu.memory_space<vmem>>, vector<16x32xf32>
    tpu.vector_store %arg5[%c0_11, %c0_12], %24 {strides = array<i32>} : memref<16x32xf32, #tpu.memory_space<vmem>>, vector<16x32xf32>,
    return
  }
  func.func @transform_0(%arg0: i32, %arg1: memref<2xi32, #tpu.memory_space<smem>>) -> (i32, i32) {
    %c0_i32 = arith.constant 0 : i32
    %c0_i32_0 = arith.constant 0 : i32
    return %arg0, %c0_i32 : i32, i32
  }
  func.func @transform_1(%arg0: i32, %arg1: memref<2xi32, #tpu.memory_space<smem>>) -> (i32, i32, i32) {
    %0 = arith.index_cast %arg0 : i32 to index
    %1 = memref.load %arg1[%0] : memref<2xi32, #tpu.memory_space<smem>>
    %c0_i32 = arith.constant 0 : i32
    %c0_i32_0 = arith.constant 0 : i32
    %c0_i32_1 = arith.constant 0 : i32
    return %1, %c0_i32, %c0_i32_0 : i32, i32, i32
  }
  func.func @transform_2(%arg0: i32, %arg1: memref<2xi32, #tpu.memory_space<smem>>) -> (i32, i32, i32) {
    %0 = arith.index_cast %arg0 : i32 to index
    %1 = memref.load %arg1[%0] : memref<2xi32, #tpu.memory_space<smem>>
    %c0_i32 = arith.constant 0 : i32
    %c0_i32_0 = arith.constant 0 : i32
    %c0_i32_1 = arith.constant 0 : i32
    return %1, %c0_i32, %c0_i32_0 : i32, i32, i32
  }
  func.func @transform_3(%arg0: i32, %arg1: memref<2xi32, #tpu.memory_space<smem>>) -> (i32, i32) {
    %c0_i32 = arith.constant 0 : i32
    %c0_i32_0 = arith.constant 0 : i32
    return %arg0, %c0_i32 : i32, i32
  }
}

</mosaic_0001>

<llo_original>
// kernel: tpu_custom_call.1
$region0: #{tpu_custom_call.1}
  #allocation0 [shape = 'u32[]', space=smem, size = 0x4, offset = 0x4, fixed_abs, tag = 'smem constant byte address 0x4 - core index']
  #allocation1 [shape = 'u32[144,128]{1,0:T(1,128)}', space=vmem, size = 0x12000, scoped, tag = 'internal scratch']
  #allocation2 [shape = 's32[1]{0}', space=sflag, size = 0x4, scoped, tag = 'scoped memory for tpu_custom_call.1']
  #allocation3 [shape = 'u8[512]{0}', space=smem, size = 0x200, scoped, tag = 'prefetched SMEM operand 0']
  %s0 = inlined_call_operand.hbm [shape: s32[2], index: 0, kind: input, shape index: {}]
  %s1 = inlined_call_operand.hbm [shape: f32[32,32], index: 1, kind: input, shape index: {}]
  %s2 = inlined_call_operand.vmem [shape: f32[2,1,32], index: 2, kind: input, shape index: {}]
  %s3 = inlined_call_operand.vmem [shape: f32[2,1,32], index: 3, kind: input, shape index: {}]
  %s4 = inlined_call_operand.hbm [shape: f32[32,32], index: 4, kind: output, shape index: {}]
  %s5 = sld [smem:[#allocation0]]
  $region49: #{tpu_custom_call.1} parent=0
    _
  %s7 = ssub.s32 1, %s5
  %s8 = scalar_select 0, %s7, %s5
  %10 = dma.hbm_to_smem %s0, 16, [#allocation3], [#allocation2]
  %11 = dma.done [#allocation2], 16
  %12 = sfence
  $region1: #{tpu_custom_call.1} parent=0
    #allocation4 [shape = 'u8[16384]{0}', space=vmem, size = 0x4000, scoped, tag = 'input window, operand 1']
    #allocation5 [shape = 's32[2]{0}', space=sflag, size = 0x8, scoped, tag = 'scoped memory for tpu_custom_call.1']
    #allocation6 [shape = 's32[2]{0}', space=sflag, size = 0x8, scoped, tag = 'scoped memory for tpu_custom_call.1']
    #allocation7 [shape = 'u8[16384]{0}', space=vmem, size = 0x4000, scoped, tag = 'output window, operand 0']
    %13 = vsyncpa [#allocation5], 0
    %s14 = scalar_lea.sflag [#allocation5], 1
    %15 = vsyncpa %s14, 0
    %16 = vsyncpa [#allocation6], 0
    %s17 = scalar_lea.sflag [#allocation6], 1
    %18 = vsyncpa %s17, 0
    loop: start=0, step=1, limit=4
    $region2: #{tpu_custom_call.1} parent=1 // loop_pre_header
      _
    $region3: #{tpu_custom_call.1} parent=1 // loop_header
      %s20 = sphi 0, %s24
      %p21 = scmp.ge.s32.totalorder %s20, 4
      %s30 = sphi 0, %s32
      %s33 = sphi 0, %s30
      %s34 = sphi 0, %s33
      %s50 = sphi 0, %s34
      %s58 = sphi 0, %s60
      %s61 = sphi 0, %s58
      %s62 = sphi 0, %s61
      %s78 = sphi 0, %s62
      %s86 = sphi 0, %s88
      %s89 = sphi 0, %s86
      %s90 = sphi 0, %s89
      %s106 = sphi 0, %s90
      %s112 = sphi 0, %s114
      %s115 = sphi 0, %s112
      %s116 = sphi 0, %s115
      %s132 = sphi 0, %s116
    $region4: #{tpu_custom_call.1} parent=1 // loop_header_branch
      %23 = sbr.rel (%p21) target = $region8
    $region5: #{tpu_custom_call.1} parent=1 // loop_body
      %s25 = ssub.s32 %s20, 1
      %s26 = ssub.s32 %s20, 2
      %s27 = sadd.s32 %s20, 1
      %s28 = ssub.s32 %s20, %s27
      %p29 = scmp.eq.s32.totalorder %s28, 0
      %s31 = sadd.s32 %s30, 1
      %s32 = scalar_select %p29, %s30, %s31
      %p35 = pneg %p29
      %p36 = scmp.eq.s32.totalorder %s20, 1
      %p37 = por %p35, %p36
      %p38 = scmp.ne.s32.totalorder %s30, %s33
      %p39 = scmp.eq.s32.totalorder %s20, 0
      %p40 = por %p38, %p39
      %p41 = scmp.ne.s32.totalorder %s30, %s33
      %p42 = scmp.eq.s32.totalorder %s25, 1
      %p43 = por %p41, %p42
      %p44 = scmp.ne.s32.totalorder %s33, %s34
      %p45 = scmp.eq.s32.totalorder %s25, 0
      %p46 = por %p44, %p45
      %p47 = scmp.ne.s32.totalorder %s33, %s34
      %p48 = scmp.eq.s32.totalorder %s26, 1
      %p49 = por %p47, %p48
      %p51 = scmp.ne.s32.totalorder %s34, %s50
      %p52 = scmp.eq.s32.totalorder %s26, 0
      %p53 = por %p51, %p52
      %s54 = sld [smem:[#allocation3 + %s20]]
      %s55 = sld [smem:[#allocation3 + %s27]]
      %s56 = ssub.s32 %s54, %s55
      %p57 = scmp.eq.s32.totalorder %s56, 0
      %s59 = sadd.s32 %s58, 1
      %s60 = scalar_select %p57, %s58, %s59
      %p63 = pneg %p57
      %p64 = scmp.eq.s32.totalorder %s20, 1
      %p65 = por %p63, %p64
      %p66 = scmp.ne.s32.totalorder %s58, %s61
      %p67 = scmp.eq.s32.totalorder %s20, 0
      %p68 = por %p66, %p67
      %p69 = scmp.ne.s32.totalorder %s58, %s61
      %p70 = scmp.eq.s32.totalorder %s25, 1
      %p71 = por %p69, %p70
      %p72 = scmp.ne.s32.totalorder %s61, %s62
      %p73 = scmp.eq.s32.totalorder %s25, 0
      %p74 = por %p72, %p73
      %p75 = scmp.ne.s32.totalorder %s61, %s62
      %p76 = scmp.eq.s32.totalorder %s26, 1
      %p77 = por %p75, %p76
      %p79 = scmp.ne.s32.totalorder %s62, %s78
      %p80 = scmp.eq.s32.totalorder %s26, 0
      %p81 = por %p79, %p80
      %s82 = sld [smem:[#allocation3 + %s20]]
      %s83 = sld [smem:[#allocation3 + %s27]]
      %s84 = ssub.s32 %s82, %s83
      %p85 = scmp.eq.s32.totalorder %s84, 0
      %s87 = sadd.s32 %s86, 1
      %s88 = scalar_select %p85, %s86, %s87
      %p91 = pneg %p85
      %p92 = scmp.eq.s32.totalorder %s20, 1
      %p93 = por %p91, %p92
      %p94 = scmp.ne.s32.totalorder %s86, %s89
      %p95 = scmp.eq.s32.totalorder %s20, 0
      %p96 = por %p94, %p95
      %p97 = scmp.ne.s32.totalorder %s86, %s89
      %p98 = scmp.eq.s32.totalorder %s25, 1
      %p99 = por %p97, %p98
      %p100 = scmp.ne.s32.totalorder %s89, %s90
      %p101 = scmp.eq.s32.totalorder %s25, 0
      %p102 = por %p100, %p101
      %p103 = scmp.ne.s32.totalorder %s89, %s90
      %p104 = scmp.eq.s32.totalorder %s26, 1
      %p105 = por %p103, %p104
      %p107 = scmp.ne.s32.totalorder %s90, %s106
      %p108 = scmp.eq.s32.totalorder %s26, 0
      %p109 = por %p107, %p108
      %s110 = ssub.s32 %s20, %s27
      %p111 = scmp.eq.s32.totalorder %s110, 0
      %s113 = sadd.s32 %s112, 1
      %s114 = scalar_select %p111, %s112, %s113
      %p117 = pneg %p111
      %p118 = scmp.eq.s32.totalorder %s20, 1
      %p119 = por %p117, %p118
      %p120 = scmp.ne.s32.totalorder %s112, %s115
      %p121 = scmp.eq.s32.totalorder %s20, 0
      %p122 = por %p120, %p121
      %p123 = scmp.ne.s32.totalorder %s112, %s115
      %p124 = scmp.eq.s32.totalorder %s25, 1
      %p125 = por %p123, %p124
      %p126 = scmp.ne.s32.totalorder %s115, %s116
      %p127 = scmp.eq.s32.totalorder %s25, 0
      %p128 = por %p126, %p127
      %p129 = scmp.ne.s32.totalorder %s115, %s116
      %p130 = scmp.eq.s32.totalorder %s26, 1
      %p131 = por %p129, %p130
      %p133 = scmp.ne.s32.totalorder %s116, %s132
      %p134 = scmp.eq.s32.totalorder %s26, 0
      %p135 = por %p133, %p134
      %p136 = scmp.le.s32.totalorder 1, %s20
      %p137 = scmp.lt.s32.totalorder %s20, 3
      %p138 = pnand %p136, %p137
      %p139 = pneg %p138
      // Predicated region
      $region9: #{tpu_custom_call.1} parent=5 // pred_check
        _
      $region10: #{tpu_custom_call.1} parent=5 // pred_check_branch
        %141 = sbr.rel (%p138) target = $region12
      $region11: #{tpu_custom_call.1} parent=5 // pred_region
        %s142 = ssub.s32 %s20, 1
      $region12: #{tpu_custom_call.1} parent=5 // pred_fallthru
        _
      %p143 = scmp.lt.s32.totalorder %s20, 2
      // Predicated region
      $region13: #{tpu_custom_call.1} parent=5 // pred_check
        %p144 = pneg %p143
      $region14: #{tpu_custom_call.1} parent=5 // pred_check_branch
        %146 = sbr.rel (%p144) target = $region16
      $region15: #{tpu_custom_call.1} parent=5 // pred_region
        // Predicated region
        $region17: #{tpu_custom_call.1} parent=15 // pred_check
          %p147 = pneg %p40
        $region18: #{tpu_custom_call.1} parent=15 // pred_check_branch
          %149 = sbr.rel (%p147) target = $region20
        $region19: #{tpu_custom_call.1} parent=15 // pred_region
          %s150 = sand.u32 %s30, 1
          %s151 = scalar_lea.sflag [#allocation5], %s150
          %s152 = sand.u32 %s30, 1
          %s153 = smul.addr %s152, 16
          %s154 = scalar_lea.vmem [#allocation4], %s153
          %s155 = smul.u32 2, %s20
          %s157 = ssub.s32 256, 256
          %158 = vsyncadd %s151, %s157
          %s159 = smul.addr %s155, 128
          %s160 = scalar_lea.hbm %s1, %s159
          %s161 = sshll.u32 %s154, 4
          %s162 = int_to_ptr.vmem [resolvable:$true] %s161
          %167 = dma.hbm_to_vmem [thread:$0]  %s160, 256, %s162, %s151, 128, 128, 8
        $region20: #{tpu_custom_call.1} parent=15 // pred_fallthru
          _
        // Predicated region
        $region21: #{tpu_custom_call.1} parent=15 // pred_check
          %p168 = pneg %p68
        $region22: #{tpu_custom_call.1} parent=15 // pred_check_branch
          %170 = sbr.rel (%p168) target = $region24
        $region23: #{tpu_custom_call.1} parent=15 // pred_region
          %s171 = sld [smem:[#allocation3 + %s20]]
          %p172 = scmp.lt.s32.totalorder %s171, 1
          %s173 = scalar_select %p172, %s171, 1
          %s174 = scalar_lea.vmem %s2, %s173
          %s175 = sld [smem:[#allocation3 + %s20]]
        $region24: #{tpu_custom_call.1} parent=15 // pred_fallthru
          _
        // Predicated region
        $region25: #{tpu_custom_call.1} parent=15 // pred_check
          %p176 = pneg %p96
        $region26: #{tpu_custom_call.1} parent=15 // pred_check_branch
          %178 = sbr.rel (%p176) target = $region28
        $region27: #{tpu_custom_call.1} parent=15 // pred_region
          %s179 = sld [smem:[#allocation3 + %s20]]
          %p180 = scmp.lt.s32.totalorder %s179, 1
          %s181 = scalar_select %p180, %s179, 1
          %s182 = scalar_lea.vmem %s3, %s181
          %s183 = sld [smem:[#allocation3 + %s20]]
        $region28: #{tpu_custom_call.1} parent=15 // pred_fallthru
          _
      $region16: #{tpu_custom_call.1} parent=5 // pred_fallthru
        _
      %p184 = scmp.le.s32.totalorder 1, %s20
      %p185 = scmp.lt.s32.totalorder %s20, 3
      %p186 = pnand %p184, %p185
      %p187 = pneg %p186
      // Predicated region
      $region29: #{tpu_custom_call.1} parent=5 // pred_check
        _
      $region30: #{tpu_custom_call.1} parent=5 // pred_check_branch
        %189 = sbr.rel (%p186) target = $region32
      $region31: #{tpu_custom_call.1} parent=5 // pred_region
        %s190 = ssub.s32 %s20, 1
        %s191 = sand.u32 %s33, 1
        %s192 = scalar_lea.sflag [#allocation5], %s191
        %s193 = sand.u32 %s33, 1
        %s194 = smul.addr %s193, 16
        %s195 = scalar_lea.vmem [#allocation4], %s194
        // Predicated region
        $region33: #{tpu_custom_call.1} parent=31 // pred_check
          %p196 = pneg %p46
        $region34: #{tpu_custom_call.1} parent=31 // pred_check_branch
          %198 = sbr.rel (%p196) target = $region36
        $region35: #{tpu_custom_call.1} parent=31 // pred_region
          %199 = dma.done %s192, 256
        $region36: #{tpu_custom_call.1} parent=31 // pred_fallthru
          _
        %s200 = sand.u32 %s33, 1
        %s201 = scalar_lea.sflag [#allocation5], %s200
        %s202 = sand.u32 %s33, 1
        %s203 = smul.addr %s202, 16
        %s204 = scalar_lea.vmem [#allocation4], %s203
        %p205 = pneg %p46
        %p206 = pneg %p43
        %s207 = sld [smem:[#allocation3 + %s25]]
        %p208 = scmp.lt.s32.totalorder %s207, 1
        %s209 = scalar_select %p208, %s207, 1
        %s210 = scalar_lea.vmem %s2, %s209
        %p211 = pneg %p74
        %p212 = pneg %p71
        %s213 = sld [smem:[#allocation3 + %s25]]
        %p214 = scmp.lt.s32.totalorder %s213, 1
        %s215 = scalar_select %p214, %s213, 1
        %s216 = scalar_lea.vmem %s3, %s215
        %p217 = pneg %p102
        %p218 = pneg %p99
        %p219 = pneg %p128
        %p220 = pneg %p125
        %s221 = sand.u32 %s115, 1
        %s222 = scalar_lea.sflag [#allocation6], %s221
        %s223 = sand.u32 %s115, 1
        %s224 = smul.addr %s223, 16
        %s225 = scalar_lea.vmem [#allocation7], %s224
        %s226 = smul.u32 2, %s25
        %s227 = sld [smem:[#allocation3 + %s25]]
        %p228 = scmp.lt.s32.totalorder %s227, 1
        %s229 = scalar_select %p228, %s227, 1
        %s230 = scalar_lea.vmem %s2, %s229
        %s231 = sld [smem:[#allocation3 + %s25]]
        %s232 = sld [smem:[#allocation3 + %s25]]
        %p233 = scmp.lt.s32.totalorder %s232, 1
        %s234 = scalar_select %p233, %s232, 1
        %s235 = scalar_lea.vmem %s3, %s234
        %s236 = sld [smem:[#allocation3 + %s25]]
        %s237 = smul.u32 2, %s25
        %v238 = vld [vmem:[%s195] sm:$0xff]
        %v239 = vld [vmem:[%s195 + $0x8] sm:$0xff]
        %vm240 = vcmask 261120
        %v241 = vsel %vm240, %v238, 0.0
        %242 = vadd.xlane.f32.xlu0 %v241
        %v243 = vpop.xlane.xlu0 %242
        %v244 = vsel %vm240, %v239, 0.0
        %245 = vadd.xlane.f32.xlu0 %v244
        %v246 = vpop.xlane.xlu0 %245
        %v247 = vmul.f32 %v243, 0.03125
        %v248 = vmul.f32 %v246, 0.03125
        %v249 = vsub.f32 %v238, %v247
        %v250 = vsub.f32 %v239, %v248
        %v251 = vmul.f32 %v249, %v249
        %v252 = vmul.f32 %v250, %v250
        %v253 = vsel %vm240, %v251, 0.0
        %254 = vadd.xlane.f32.xlu0 %v253
        %v255 = vpop.xlane.xlu0 %254
        %v256 = vsel %vm240, %v252, 0.0
        %257 = vadd.xlane.f32.xlu0 %v256
        %v258 = vpop.xlane.xlu0 %257
        %v259 = vmul.f32 %v255, 0.03125
        %v260 = vmul.f32 %v258, 0.03125
        %v261 = vadd.f32 %v259, 1e-05
        %v262 = vadd.f32 %v260, 1e-05
        %v263 = vrsqrt.pop %v261
        %v264 = vrsqrt.pop %v262
        %v265 = vmul.f32 %v249, %v263
        %v266 = vmul.f32 %v250, %v264
        %v267 = vld [vmem:[%s230] sm:$0x1]
        %v268 = vld [vmem:[%s235] sm:$0x1]
        %v270 = vlaneseq
        %v271 = vshrl.u32 %v270, 7
        %v272 = vsub.s32 0, %v271
        %v273 = vrot.slane %v267, %v272
        %v275 = vmul.f32 %v265, %v273
        %v276 = vmul.f32 %v266, %v273
        %v278 = vlaneseq
        %v279 = vshrl.u32 %v278, 7
        %v280 = vsub.s32 0, %v279
        %v281 = vrot.slane %v268, %v280
        %v283 = vadd.f32 %v275, %v281
        %v284 = vadd.f32 %v276, %v281
        %285 = vst.msk [vmem:[%s225] sm:$0xff] %vm240, %v283
        %286 = vst.msk [vmem:[%s225 + $0x8] sm:$0xff] %vm240, %v284
        %s287 = sand.u32 %s115, 1
        %s288 = scalar_lea.sflag [#allocation6], %s287
        %s289 = sand.u32 %s115, 1
        %s290 = smul.addr %s289, 16
        %s291 = scalar_lea.vmem [#allocation7], %s290
        // Predicated region
        $region37: #{tpu_custom_call.1} parent=31 // pred_check
          %p292 = pneg %p125
        $region38: #{tpu_custom_call.1} parent=31 // pred_check_branch
          %294 = sbr.rel (%p292) target = $region40
        $region39: #{tpu_custom_call.1} parent=31 // pred_region
          %s295 = smul.u32 2, %s25
          %s297 = ssub.s32 256, 256
          %298 = vsyncadd %s288, %s297
          %s299 = smul.addr %s295, 128
          %s300 = scalar_lea.hbm %s4, %s299
          %s301 = sshll.u32 %s291, 4
          %s302 = int_to_ptr.vmem [resolvable:$true] %s301
          %307 = dma.vmem_to_hbm [thread:$0]  %s302, 256, %s300, %s288, 128, 128, 8
        $region40: #{tpu_custom_call.1} parent=31 // pred_fallthru
          _
      $region32: #{tpu_custom_call.1} parent=5 // pred_fallthru
        _
      %p308 = scmp.le.s32.totalorder 2, %s20
      // Predicated region
      $region41: #{tpu_custom_call.1} parent=5 // pred_check
        %p309 = pneg %p308
      $region42: #{tpu_custom_call.1} parent=5 // pred_check_branch
        %311 = sbr.rel (%p309) target = $region44
      $region43: #{tpu_custom_call.1} parent=5 // pred_region
        %s312 = ssub.s32 %s20, 2
        // Predicated region
        $region45: #{tpu_custom_call.1} parent=43 // pred_check
          %p313 = pneg %p131
        $region46: #{tpu_custom_call.1} parent=43 // pred_check_branch
          %315 = sbr.rel (%p313) target = $region48
        $region47: #{tpu_custom_call.1} parent=43 // pred_region
          %s316 = sand.u32 %s116, 1
          %s317 = scalar_lea.sflag [#allocation6], %s316
          %s318 = sand.u32 %s116, 1
          %s319 = smul.addr %s318, 16
          %s320 = scalar_lea.vmem [#allocation7], %s319
          %321 = dma.done %s317, 256
        $region48: #{tpu_custom_call.1} parent=43 // pred_fallthru
          _
      $region44: #{tpu_custom_call.1} parent=5 // pred_fallthru
        _
    $region6: #{tpu_custom_call.1} parent=1 // loop_footer
      %s24 = sadd.s32 1, %s20
    $region7: #{tpu_custom_call.1} parent=1 // loop_footer_branch
      %19 = sbr.rel target = $region3
    $region8: #{tpu_custom_call.1} parent=1 // loop_exit
      _
    %322 = vsyncpa [#allocation5], 1
    %s323 = scalar_lea.sflag [#allocation5], 1
    %324 = vsyncpa %s323, 1
    %325 = vsyncpa [#allocation6], 1
    %s326 = scalar_lea.sflag [#allocation6], 1
    %327 = vsyncpa %s326, 1

</llo_original>
